<compile_context>
chip_gen: v6e
topology: v6e:2x2x1
jax: 0.10.0
libtpu: 0.0.40
codegen_flags: <defaults>
</compile_context>

<pallas_src>
import functools
import math

import jax
import jax.numpy as jnp
import numpy as np
from jax.experimental import pallas as pl
from jax.experimental.pallas import tpu as pltpu

EPS = 1e-8          # PixelwiseVectorNorm epsilon
SLOPE = 0.2         # LeakyReLU slope


# ----------------------------- fused Pallas kernel ---------------------------

def _generator_kernel(x_ref, wf_ref, bf_ref, pn_ref, mconv_ref, bconv_ref,
                      mrgb_ref, brgb_ref, o_ref, *, slope, eps):
    f32 = jnp.float32
    bf16 = jnp.bfloat16
    x = x_ref[...].astype(f32)

    # PixelNorm over the latent dimension (VPU reduce + EUP rsqrt, f32).
    x = x * jax.lax.rsqrt(jnp.mean(x * x, axis=-1, keepdims=True) + eps)

    # Format layer: EqualizedLinear (He scale + NCHW->pixel-major permutation folded
    # into wf/bf) followed by LeakyReLU.  y[:, p*fd + c] = pixel p, channel c.
    y = jnp.dot(x.astype(bf16), wf_ref[...], preferred_element_type=f32) + bf_ref[...]
    y = jnp.maximum(y, slope * y)

    # Per-pixel PixelNorm over the fd channels of each of the 16 pixels, fused into a
    # single matmul against pnmat = kron(I16, ones(fd,fd)/fd).
    y = y * jax.lax.rsqrt(
        jnp.dot((y * y).astype(bf16), pn_ref[...], preferred_element_type=f32) + eps)

    # first_block: 3x3 equalized conv (pad=1) on the fixed 4x4 grid as one dense
    # linear map, then LeakyReLU and PixelNorm.
    z = jnp.dot(y.astype(bf16), mconv_ref[...], preferred_element_type=f32) + bconv_ref[...]
    z = jnp.maximum(z, slope * z)
    z = z * jax.lax.rsqrt(
        jnp.dot((z * z).astype(bf16), pn_ref[...], preferred_element_type=f32) + eps)

    # toRGB: 1x1 equalized conv; output channels zero-padded so last dim = 16*rgb_pad
    # (128-wide, lane-dense store).  last_activation=None -> identity.
    o_ref[...] = (jnp.dot(z.astype(bf16), mrgb_ref[...], preferred_element_type=f32)
                  + brgb_ref[...])


# ---------------------- one-time operand preparation (numpy) -----------------

def prepare_operands(params):
    """Fold He scales / permutations / conv-as-matmul into bf16 weight operands.

    Done ONCE with numpy (outside the jitted forward) so no kron temporaries or
    transposes are re-materialized per call.
    """
    w_lin = np.asarray(params["w_lin"], np.float32)    # (16fd, latent)
    b_lin = np.asarray(params["b_lin"], np.float32)    # (16fd,)
    w_conv = np.asarray(params["w_conv"], np.float32)  # (fd, fd, 3, 3)
    b_conv = np.asarray(params["b_conv"], np.float32)  # (fd,)
    w_rgb = np.asarray(params["w_rgb"], np.float32)    # (out, fd, 1, 1)
    b_rgb = np.asarray(params["b_rgb"], np.float32)    # (out,)

    fd = w_conv.shape[0]
    latent = w_lin.shape[1]
    out_dim = w_rgb.shape[0]
    rgb_pad = ((out_dim + 7) // 8) * 8                 # 16*rgb_pad multiple of 128

    c_lin = math.sqrt(2.0 / latent)
    c_conv = math.sqrt(2.0 / (fd * 9))
    c_rgb = math.sqrt(2.0 / fd)

    # Format layer: permute columns so output is pixel-major / channels-last
    # (column p*fd + c for pixel p = h*4+w, channel c); fold the He scale.
    w_fmt = (w_lin.T.reshape(latent, fd, 16).transpose(0, 2, 1)
             .reshape(latent, 16 * fd) * c_lin)
    b_fmt = (b_lin.reshape(fd, 16).T.reshape(1, 16 * fd) * c_lin)

    eye16 = np.eye(16, dtype=np.float32)
    # Fused per-pixel PixelNorm matrix (block-mean replicated over the fd channels).
    pnmat = np.kron(eye16, np.full((fd, fd), 1.0 / fd, np.float32))   # (16fd, 16fd)

    # 3x3 conv (pad=1) on the 4x4 grid as one dense map:
    # M = sum_{kh,kw} kron(S_khkw, W[:,:,kh,kw].T) * c_conv.
    s = np.zeros((3, 3, 16, 16), np.float32)
    for kh in range(3):
        for kw in range(3):
            for h in range(4):
                for w in range(4):
                    hi, wi = h + kh - 1, w + kw - 1
                    if 0 <= hi < 4 and 0 <= wi < 4:
                        s[kh, kw, hi * 4 + wi, h * 4 + w] = 1.0
    m_conv = np.zeros((16 * fd, 16 * fd), np.float32)
    for kh in range(3):
        for kw in range(3):
            m_conv += np.kron(s[kh, kw], w_conv[:, :, kh, kw].T)
    m_conv *= c_conv                                                   # (16fd, 16fd)
    b_conv_t = np.tile(b_conv, 16)[None, :] * c_conv                   # (1, 16fd)

    # toRGB 1x1 conv, output channels zero-padded to rgb_pad.
    w_rgb_p = np.zeros((fd, rgb_pad), np.float32)
    w_rgb_p[:, :out_dim] = w_rgb.reshape(out_dim, fd).T
    m_rgb = np.kron(eye16, w_rgb_p) * c_rgb                            # (16fd, 16*pad)
    b_rgb_p = np.zeros((rgb_pad,), np.float32)
    b_rgb_p[:out_dim] = b_rgb
    b_rgb_t = np.tile(b_rgb_p, 16)[None, :] * c_rgb                    # (1, 16*pad)

    # Weight matrices in bf16 (native MXU rate, half the VMEM/DMA); biases stay f32.
    operands = (
        jnp.asarray(w_fmt, jnp.bfloat16),
        jnp.asarray(b_fmt, jnp.float32),
        jnp.asarray(pnmat, jnp.bfloat16),
        jnp.asarray(m_conv, jnp.bfloat16),
        jnp.asarray(b_conv_t, jnp.float32),
        jnp.asarray(m_rgb, jnp.bfloat16),
        jnp.asarray(b_rgb_t, jnp.float32),
    )
    return operands


# --------------------------------- forward -----------------------------------

def _round_up(v, m):
    return ((v + m - 1) // m) * m


def generator_forward(x, operands, *, out_dim, batch_tile=1024):
    """x: (N, latent) f32, operands from prepare_operands -> (N, out_dim, 4, 4) f32."""
    n, latent = x.shape
    m_conv = operands[3]
    m_rgb = operands[5]
    fd = m_conv.shape[0] // 16
    kout = m_rgb.shape[1]                 # 16 * rgb_pad (multiple of 128)
    rgb_pad = kout // 16

    # Row grid over the batch.  Large tiles amortize per-step overhead; when the
    # batch is large enough, cap the tile so there are >=2 "parallel" grid steps
    # for v7x's two TensorCores.
    bn = min(n, batch_tile)
    if n >= 512:
        bn = min(bn, max(256, _round_up(pl.cdiv(n, 2), 8)))
    grid = (pl.cdiv(n, bn),)

    def rows_spec(cols):
        return pl.BlockSpec((bn, cols), lambda i: (i, 0))

    def full_spec(arr):
        # Constant index map -> the pipeline re-visits the same block and skips
        # re-DMA of the weights across grid steps.
        return pl.BlockSpec(arr.shape, lambda i: (0, 0))

    # Explicit VMEM budget from actual operand footprint (+ pipelined I/O blocks and
    # f32 intermediates), capped at 64 MiB so it is valid on every generation.
    weight_bytes = sum(int(op.size) * op.dtype.itemsize for op in operands)
    io_bytes = 2 * bn * (latent * 4 + kout * 4)
    act_bytes = 6 * bn * 16 * fd * 4
    vmem_limit = int(min(64 << 20,
                         max(16 << 20, 2 * weight_bytes + io_bytes + act_bytes + (2 << 20))))

    kern = functools.partial(_generator_kernel, slope=SLOPE, eps=EPS)
    out = pl.pallas_call(
        kern,
        out_shape=jax.ShapeDtypeStruct((n, kout), jnp.float32),
        grid=grid,
        in_specs=[rows_spec(latent)] + [full_spec(op) for op in operands],
        out_specs=rows_spec(kout),
        compiler_params=pltpu.CompilerParams(
            dimension_semantics=("parallel",),
            vmem_limit_bytes=vmem_limit),
    )(x.astype(jnp.float32), *operands)

    # (N, 16*rgb_pad) pixel-major -> (N, 4, 4, rgb_pad) -> slice RGB -> NCHW.
    return out.reshape(n, 4, 4, rgb_pad)[:, :, :, :out_dim].transpose(0, 3, 1, 2)


# ------------------------------ init & reference -----------------------------

def init_params(key, latent_dim, first_depth, output_dim):
    k1, k2, k3 = jax.random.split(key, 3)
    fd = first_depth
    return {
        "w_lin": jax.random.normal(k1, (16 * fd, latent_dim), jnp.float32),
        "b_lin": jnp.zeros((16 * fd,), jnp.float32),
        "w_conv": jax.random.normal(k2, (fd, fd, 3, 3), jnp.float32),
        "b_conv": jnp.zeros((fd,), jnp.float32),
        "w_rgb": jax.random.normal(k3, (output_dim, fd, 1, 1), jnp.float32),
        "b_rgb": jnp.zeros((output_dim,), jnp.float32),
    }


def reference_forward(x, params):
    def pn(v, axis):
        return v * jax.lax.rsqrt(jnp.mean(v * v, axis=axis, keepdims=True) + EPS)

    n, latent = x.shape
    fd = params["w_conv"].shape[0]
    c_lin = math.sqrt(2.0 / latent)
    c_conv = math.sqrt(2.0 / (fd * 9))
    c_rgb = math.sqrt(2.0 / fd)

    x = pn(x, 1)
    y = (x @ params["w_lin"].T + params["b_lin"]) * c_lin
    y = jnp.where(y >= 0, y, SLOPE * y)
    y = y.reshape(n, fd, 4, 4)
    y = pn(y, 1)
    y = jax.lax.conv_general_dilated(y, params["w_conv"], (1, 1), "SAME",
                                     dimension_numbers=("NCHW", "OIHW", "NCHW"))
    y = (y + params["b_conv"][None, :, None, None]) * c_conv
    y = jnp.where(y >= 0, y, SLOPE * y)
    y = pn(y, 1)
    rgb = jax.lax.conv_general_dilated(y, params["w_rgb"], (1, 1), "SAME",
                                       dimension_numbers=("NCHW", "OIHW", "NCHW"))
    return (rgb + params["b_rgb"][None, :, None, None]) * c_rgb


# ----------------------------------- main ------------------------------------

if __name__ == "__main__":
    N, LATENT_DIM, FIRST_DEPTH, OUTPUT_DIM = 2, 32, 16, 3

    key = jax.random.PRNGKey(0)
    k_params, k_x = jax.random.split(key)
    params = init_params(k_params, LATENT_DIM, FIRST_DEPTH, OUTPUT_DIM)
    x = jax.random.normal(k_x, (N, LATENT_DIM), jnp.float32)

    # One-time (numpy) operand prep; only the actual forward is jitted.
    operands = prepare_operands(params)

    fwd = jax.jit(generator_forward, static_argnames=("out_dim", "batch_tile"))
    out = jax.block_until_ready(fwd(x, operands, out_dim=OUTPUT_DIM, batch_tile=1024))
    assert out.shape == (N, OUTPUT_DIM, 4, 4), out.shape

    ref = jax.block_until_ready(reference_forward(x, params))
    # bf16 weight/activation streaming -> looser tolerance than pure-f32 version.
    max_err = float(jnp.max(jnp.abs(out - ref)))
    assert jnp.allclose(out, ref, atol=5e-2, rtol=5e-2), max_err

    print("KERNEL_OK")
</pallas_src>

<mosaic_0001>
module attributes {stable_mosaic.version = 11 : i64} {
  func.func @_generator_kernel(%arg0: i32, %arg1: memref<2x32xf32, #tpu.memory_space<vmem>>, %arg2: memref<32x256xbf16, #tpu.memory_space<vmem>>, %arg3: memref<1x256xf32, #tpu.memory_space<vmem>>, %arg4: memref<256x256xbf16, #tpu.memory_space<vmem>>, %arg5: memref<256x256xbf16, #tpu.memory_space<vmem>>, %arg6: memref<1x256xf32, #tpu.memory_space<vmem>>, %arg7: memref<256x128xbf16, #tpu.memory_space<vmem>>, %arg8: memref<1x128xf32, #tpu.memory_space<vmem>>, %arg9: memref<2x128xf32, #tpu.memory_space<vmem>>) attributes {dimension_semantics = [#tpu.dimension_semantics<parallel>], iteration_bounds = array<i64: 1>, scalar_prefetch = 0 : i64, scratch_operands = 0 : i64, tpu.core_type = #tpu.core_type<tc>, window_params = [{transform_indices = @transform_0, window_bounds = array<i64: 2, 32>}, {pipeline_mode = #tpu.pipeline_mode<synchronous>, transform_indices = @transform_1, window_bounds = array<i64: 32, 256>}, {pipeline_mode = #tpu.pipeline_mode<synchronous>, transform_indices = @transform_2, window_bounds = array<i64: 1, 256>}, {pipeline_mode = #tpu.pipeline_mode<synchronous>, transform_indices = @transform_3, window_bounds = array<i64: 256, 256>}, {pipeline_mode = #tpu.pipeline_mode<synchronous>, transform_indices = @transform_4, window_bounds = array<i64: 256, 256>}, {pipeline_mode = #tpu.pipeline_mode<synchronous>, transform_indices = @transform_5, window_bounds = array<i64: 1, 256>}, {pipeline_mode = #tpu.pipeline_mode<synchronous>, transform_indices = @transform_6, window_bounds = array<i64: 256, 128>}, {pipeline_mode = #tpu.pipeline_mode<synchronous>, transform_indices = @transform_7, window_bounds = array<i64: 1, 128>}, {transform_indices = @transform_8, window_bounds = array<i64: 2, 128>}]} {
    %c0 = arith.constant 0 : index
    %c0_0 = arith.constant 0 : index
    %0 = vector.load %arg1[%c0, %c0_0] : memref<2x32xf32, #tpu.memory_space<vmem>>, vector<2x32xf32>
    %1 = arith.mulf %0, %0 : vector<2x32xf32>
    %cst = arith.constant dense<0.000000e+00> : vector<2xf32>
    %2 = vector.multi_reduction <add>, %1, %cst [1] : vector<2x32xf32> to vector<2xf32>
    %3 = vector.shape_cast %2 : vector<2xf32> to vector<2x1xf32>
    %cst_1 = arith.constant 3.200000e+01 : f32
    %4 = vector.broadcast %cst_1 : f32 to vector<2x1xf32>
    %5 = arith.divf %3, %4 : vector<2x1xf32>
    %cst_2 = arith.constant 9.99999993E-9 : f32
    %6 = vector.broadcast %cst_2 : f32 to vector<2x1xf32>
    %7 = arith.addf %5, %6 : vector<2x1xf32>
    %8 = math.rsqrt %7 : vector<2x1xf32>
    %9 = vector.broadcast %8 : vector<2x1xf32> to vector<2x32xf32>
    %10 = arith.mulf %0, %9 : vector<2x32xf32>
    %11 = arith.truncf %10 : vector<2x32xf32> to vector<2x32xbf16>
    %c0_3 = arith.constant 0 : index
    %c0_4 = arith.constant 0 : index
    %12 = vector.load %arg2[%c0_3, %c0_4] : memref<32x256xbf16, #tpu.memory_space<vmem>>, vector<32x256xbf16>
    %cst_5 = arith.constant dense<0.000000e+00> : vector<2x256xf32>
    %13 = tpu.matmul %11, %12, %cst_5 {dimension_numbers = #tpu.dot_dimension_numbers<[1], [0], [0], [1], [0, 0, 1, 1], [], []>} : vector<2x32xbf16>, vector<32x256xbf16>, vector<2x256xf32> -> vector<2x256xf32>
    %c0_6 = arith.constant 0 : index
    %c0_7 = arith.constant 0 : index
    %14 = vector.load %arg3[%c0_6, %c0_7] : memref<1x256xf32, #tpu.memory_space<vmem>>, vector<1x256xf32>
    %15 = vector.broadcast %14 : vector<1x256xf32> to vector<2x256xf32>
    %16 = arith.addf %13, %15 : vector<2x256xf32>
    %cst_8 = arith.constant 2.000000e-01 : f32
    %17 = vector.broadcast %cst_8 : f32 to vector<2x256xf32>
    %18 = arith.mulf %17, %16 : vector<2x256xf32>
    %19 = arith.maximumf %16, %18 : vector<2x256xf32>
    %20 = arith.mulf %19, %19 : vector<2x256xf32>
    %21 = arith.truncf %20 : vector<2x256xf32> to vector<2x256xbf16>
    %c0_9 = arith.constant 0 : index
    %c0_10 = arith.constant 0 : index
    %22 = vector.load %arg4[%c0_9, %c0_10] : memref<256x256xbf16, #tpu.memory_space<vmem>>, vector<256x256xbf16>
    %cst_11 = arith.constant dense<0.000000e+00> : vector<2x256xf32>
    %23 = tpu.matmul %21, %22, %cst_11 {dimension_numbers = #tpu.dot_dimension_numbers<[1], [0], [0], [1], [0, 0, 1, 1], [], []>} : vector<2x256xbf16>, vector<256x256xbf16>, vector<2x256xf32> -> vector<2x256xf32>
    %cst_12 = arith.constant 9.99999993E-9 : f32
    %24 = vector.broadcast %cst_12 : f32 to vector<2x256xf32>
    %25 = arith.addf %23, %24 : vector<2x256xf32>
    %26 = math.rsqrt %25 : vector<2x256xf32>
    %27 = arith.mulf %19, %26 : vector<2x256xf32>
    %28 = arith.truncf %27 : vector<2x256xf32> to vector<2x256xbf16>
    %c0_13 = arith.constant 0 : index
    %c0_14 = arith.constant 0 : index
    %29 = vector.load %arg5[%c0_13, %c0_14] : memref<256x256xbf16, #tpu.memory_space<vmem>>, vector<256x256xbf16>
    %cst_15 = arith.constant dense<0.000000e+00> : vector<2x256xf32>
    %30 = tpu.matmul %28, %29, %cst_15 {dimension_numbers = #tpu.dot_dimension_numbers<[1], [0], [0], [1], [0, 0, 1, 1], [], []>} : vector<2x256xbf16>, vector<256x256xbf16>, vector<2x256xf32> -> vector<2x256xf32>
    %c0_16 = arith.constant 0 : index
    %c0_17 = arith.constant 0 : index
    %31 = vector.load %arg6[%c0_16, %c0_17] : memref<1x256xf32, #tpu.memory_space<vmem>>, vector<1x256xf32>
    %32 = vector.broadcast %31 : vector<1x256xf32> to vector<2x256xf32>
    %33 = arith.addf %30, %32 : vector<2x256xf32>
    %cst_18 = arith.constant 2.000000e-01 : f32
    %34 = vector.broadcast %cst_18 : f32 to vector<2x256xf32>
    %35 = arith.mulf %34, %33 : vector<2x256xf32>
    %36 = arith.maximumf %33, %35 : vector<2x256xf32>
    %37 = arith.mulf %36, %36 : vector<2x256xf32>
    %38 = arith.truncf %37 : vector<2x256xf32> to vector<2x256xbf16>
    %c0_19 = arith.constant 0 : index
    %c0_20 = arith.constant 0 : index
    %39 = vector.load %arg4[%c0_19, %c0_20] : memref<256x256xbf16, #tpu.memory_space<vmem>>, vector<256x256xbf16>
    %cst_21 = arith.constant dense<0.000000e+00> : vector<2x256xf32>
    %40 = tpu.matmul %38, %39, %cst_21 {dimension_numbers = #tpu.dot_dimension_numbers<[1], [0], [0], [1], [0, 0, 1, 1], [], []>} : vector<2x256xbf16>, vector<256x256xbf16>, vector<2x256xf32> -> vector<2x256xf32>
    %cst_22 = arith.constant 9.99999993E-9 : f32
    %41 = vector.broadcast %cst_22 : f32 to vector<2x256xf32>
    %42 = arith.addf %40, %41 : vector<2x256xf32>
    %43 = math.rsqrt %42 : vector<2x256xf32>
    %44 = arith.mulf %36, %43 : vector<2x256xf32>
    %45 = arith.truncf %44 : vector<2x256xf32> to vector<2x256xbf16>
    %c0_23 = arith.constant 0 : index
    %c0_24 = arith.constant 0 : index
    %46 = vector.load %arg7[%c0_23, %c0_24] : memref<256x128xbf16, #tpu.memory_space<vmem>>, vector<256x128xbf16>
    %cst_25 = arith.constant dense<0.000000e+00> : vector<2x128xf32>
    %47 = tpu.matmul %45, %46, %cst_25 {dimension_numbers = #tpu.dot_dimension_numbers<[1], [0], [0], [1], [0, 0, 1, 1], [], []>} : vector<2x256xbf16>, vector<256x128xbf16>, vector<2x128xf32> -> vector<2x128xf32>
    %c0_26 = arith.constant 0 : index
    %c0_27 = arith.constant 0 : index
    %48 = vector.load %arg8[%c0_26, %c0_27] : memref<1x128xf32, #tpu.memory_space<vmem>>, vector<1x128xf32>
    %49 = vector.broadcast %48 : vector<1x128xf32> to vector<2x128xf32>
    %50 = arith.addf %47, %49 : vector<2x128xf32>
    %c0_28 = arith.constant 0 : index
    %c0_29 = arith.constant 0 : index
    %51 = vector.load %arg9[%c0_28, %c0_29] : memref<2x128xf32, #tpu.memory_space<vmem>>, vector<2x128xf32>
    tpu.vector_store %arg9[%c0_28, %c0_29], %50 {strides = array<i32>} : memref<2x128xf32, #tpu.memory_space<vmem>>, vector<2x128xf32>,
    return
  }
  func.func @transform_0(%arg0: i32) -> (i32, i32) {
    %c0_i32 = arith.constant 0 : i32
    %c0_i32_0 = arith.constant 0 : i32
    return %arg0, %c0_i32 : i32, i32
  }
  func.func @transform_1(%arg0: i32) -> (i32, i32) {
    %c0_i32 = arith.constant 0 : i32
    %c0_i32_0 = arith.constant 0 : i32
    %c0_i32_1 = arith.constant 0 : i32
    return %c0_i32, %c0_i32_0 : i32, i32
  }
  func.func @transform_2(%arg0: i32) -> (i32, i32) {
    %c0_i32 = arith.constant 0 : i32
    %c0_i32_0 = arith.constant 0 : i32
    %c0_i32_1 = arith.constant 0 : i32
    return %c0_i32, %c0_i32_0 : i32, i32
  }
  func.func @transform_3(%arg0: i32) -> (i32, i32) {
    %c0_i32 = arith.constant 0 : i32
    %c0_i32_0 = arith.constant 0 : i32
    %c0_i32_1 = arith.constant 0 : i32
    return %c0_i32, %c0_i32_0 : i32, i32
  }
  func.func @transform_4(%arg0: i32) -> (i32, i32) {
    %c0_i32 = arith.constant 0 : i32
    %c0_i32_0 = arith.constant 0 : i32
    %c0_i32_1 = arith.constant 0 : i32
    return %c0_i32, %c0_i32_0 : i32, i32
  }
  func.func @transform_5(%arg0: i32) -> (i32, i32) {
    %c0_i32 = arith.constant 0 : i32
    %c0_i32_0 = arith.constant 0 : i32
    %c0_i32_1 = arith.constant 0 : i32
    return %c0_i32, %c0_i32_0 : i32, i32
  }
  func.func @transform_6(%arg0: i32) -> (i32, i32) {
    %c0_i32 = arith.constant 0 : i32
    %c0_i32_0 = arith.constant 0 : i32
    %c0_i32_1 = arith.constant 0 : i32
    return %c0_i32, %c0_i32_0 : i32, i32
  }
  func.func @transform_7(%arg0: i32) -> (i32, i32) {
    %c0_i32 = arith.constant 0 : i32
    %c0_i32_0 = arith.constant 0 : i32
    %c0_i32_1 = arith.constant 0 : i32
    return %c0_i32, %c0_i32_0 : i32, i32
  }
  func.func @transform_8(%arg0: i32) -> (i32, i32) {
    %c0_i32 = arith.constant 0 : i32
    %c0_i32_0 = arith.constant 0 : i32
    return %arg0, %c0_i32 : i32, i32
  }
}

</mosaic_0001>

<llo_original>
// kernel: generator_forward.1
$region0: #{generator_forward.1}
  #allocation0 [shape = 'u32[]', space=smem, size = 0x4, offset = 0x4, fixed_abs, tag = 'smem constant byte address 0x4 - core index']
  #allocation1 [shape = 'u32[144,128]{1,0:T(1,128)}', space=vmem, size = 0x12000, scoped, tag = 'internal scratch']
  %s0 = inlined_call_operand.hbm [shape: f32[2,32], index: 0, kind: input, shape index: {}]
  %s1 = inlined_call_operand.hbm [shape: bf16[32,256], index: 1, kind: input, shape index: {}]
  %s2 = inlined_call_operand.vmem [shape: f32[1,256], index: 2, kind: input, shape index: {}]
  %s3 = inlined_call_operand.hbm [shape: bf16[256,256], index: 3, kind: input, shape index: {}]
  %s4 = inlined_call_operand.hbm [shape: bf16[256,256], index: 4, kind: input, shape index: {}]
  %s5 = inlined_call_operand.vmem [shape: f32[1,256], index: 5, kind: input, shape index: {}]
  %s6 = inlined_call_operand.hbm [shape: bf16[256,128], index: 6, kind: input, shape index: {}]
  %s7 = inlined_call_operand.vmem [shape: f32[1,128], index: 7, kind: input, shape index: {}]
  %s8 = inlined_call_operand.vmem [shape: f32[2,128], index: 8, kind: output, shape index: {}]
  %s9 = sld [smem:[#allocation0]]
  $region62: #{generator_forward.1} parent=0
    _
  %s11 = ssub.s32 1, %s9
  %s12 = scalar_select 0, %s11, %s9
  $region1: #{generator_forward.1} parent=0
    #allocation2 [shape = 'u8[1024]{0}', space=vmem, size = 0x400, scoped, tag = 'input window, operand 0, single buffered']
    #allocation3 [shape = 's32[1]{0}', space=sflag, size = 0x4, scoped, tag = 'scoped memory for generator_forward.1']
    #allocation4 [shape = 'u8[16384]{0}', space=vmem, size = 0x4000, scoped, tag = 'input window, operand 1, single buffered']
    #allocation5 [shape = 's32[1]{0}', space=sflag, size = 0x4, scoped, tag = 'scoped memory for generator_forward.1']
    #allocation6 [shape = 'u8[131072]{0}', space=vmem, size = 0x20000, scoped, tag = 'input window, operand 3, single buffered']
    #allocation7 [shape = 'u8[131072]{0}', space=vmem, size = 0x20000, scoped, tag = 'input window, operand 4, single buffered']
    #allocation8 [shape = 's32[1]{0}', space=sflag, size = 0x4, scoped, tag = 'scoped memory for generator_forward.1']
    #allocation9 [shape = 'u8[65536]{0}', space=vmem, size = 0x10000, scoped, tag = 'input window, operand 6, single buffered']
    %13 = vsyncpa [#allocation3], 0
    %14 = vsyncpa [#allocation5], 0
    %15 = vsyncpa [#allocation8], 0
    // Predicated region
    $region2: #{generator_forward.1} parent=1 // pred_check
      _
    $region3: #{generator_forward.1} parent=1 // pred_check_branch
      %17 = sbr.rel (0) target = $region5
    $region4: #{generator_forward.1} parent=1 // pred_region
      %s19 = ssub.s32 32, 32
      %20 = vsyncadd [#allocation3], %s19
      %s22 = sshll.u32 [#allocation2], 4
      %s23 = int_to_ptr.vmem [resolvable:$true] %s22
      %25 = dma.hbm_to_vmem [thread:$0]  %s0, 32, %s23, [#allocation3]
    $region5: #{generator_forward.1} parent=1 // pred_fallthru
      _
    // Predicated region
    $region6: #{generator_forward.1} parent=1 // pred_check
      _
    $region7: #{generator_forward.1} parent=1 // pred_check_branch
      %27 = sbr.rel (0) target = $region9
    $region8: #{generator_forward.1} parent=1 // pred_region
      %s29 = ssub.s32 512, 512
      %30 = vsyncadd [#allocation5], %s29
      %s31 = sshll.u32 [#allocation4], 4
      %s32 = int_to_ptr.vmem [resolvable:$true] %s31
      %37 = dma.hbm_to_vmem [thread:$0]  %s1, 512, %s32, [#allocation5], 128, 128, 8
    $region9: #{generator_forward.1} parent=1 // pred_fallthru
      _
    // Predicated region
    $region10: #{generator_forward.1} parent=1 // pred_check
      _
    $region11: #{generator_forward.1} parent=1 // pred_check_branch
      %39 = sbr.rel (0) target = $region13
    $region12: #{generator_forward.1} parent=1 // pred_region
      _
    $region13: #{generator_forward.1} parent=1 // pred_fallthru
      _
    // Predicated region
    $region14: #{generator_forward.1} parent=1 // pred_check
      _
    $region15: #{generator_forward.1} parent=1 // pred_check_branch
      %41 = sbr.rel (0) target = $region17
    $region16: #{generator_forward.1} parent=1 // pred_region
      %s43 = ssub.s32 4096, 4096
      %44 = vsyncadd [#allocation5], %s43
      %s45 = sshll.u32 [#allocation6], 4
      %s46 = int_to_ptr.vmem [resolvable:$true] %s45
      %51 = dma.hbm_to_vmem [thread:$0]  %s3, 4096, %s46, [#allocation5], 128, 128, 8
    $region17: #{generator_forward.1} parent=1 // pred_fallthru
      _
    // Predicated region
    $region18: #{generator_forward.1} parent=1 // pred_check
      _
    $region19: #{generator_forward.1} parent=1 // pred_check_branch
      %53 = sbr.rel (0) target = $region21
    $region20: #{generator_forward.1} parent=1 // pred_region
      %s55 = ssub.s32 4096, 4096
      %56 = vsyncadd [#allocation8], %s55
      %s57 = sshll.u32 [#allocation7], 4
      %s58 = int_to_ptr.vmem [resolvable:$true] %s57
      %63 = dma.hbm_to_vmem [thread:$0]  %s4, 4096, %s58, [#allocation8], 128, 128, 8
    $region21: #{generator_forward.1} parent=1 // pred_fallthru
      _
    // Predicated region
    $region22: #{generator_forward.1} parent=1 // pred_check
      _
    $region23: #{generator_forward.1} parent=1 // pred_check_branch
      %65 = sbr.rel (0) target = $region25
    $region24: #{generator_forward.1} parent=1 // pred_region
      _
    $region25: #{generator_forward.1} parent=1 // pred_fallthru
      _
    // Predicated region
    $region26: #{generator_forward.1} parent=1 // pred_check
      _
    $region27: #{generator_forward.1} parent=1 // pred_check_branch
      %67 = sbr.rel (0) target = $region29
    $region28: #{generator_forward.1} parent=1 // pred_region
      %s69 = ssub.s32 2048, 2048
      %70 = vsyncadd [#allocation8], %s69
      %s71 = sshll.u32 [#allocation9], 4
      %s72 = int_to_ptr.vmem [resolvable:$true] %s71
      %77 = dma.hbm_to_vmem [thread:$0]  %s6, 2048, %s72, [#allocation8], 64, 64, 4
    $region29: #{generator_forward.1} parent=1 // pred_fallthru
      _
    // Predicated region
    $region30: #{generator_forward.1} parent=1 // pred_check
      _
    $region31: #{generator_forward.1} parent=1 // pred_check_branch
      %79 = sbr.rel (0) target = $region33
    $region32: #{generator_forward.1} parent=1 // pred_region
      _
    $region33: #{generator_forward.1} parent=1 // pred_fallthru
      _
    // Predicated region
    $region34: #{generator_forward.1} parent=1 // pred_check
      _
    $region35: #{generator_forward.1} parent=1 // pred_check_branch
      %81 = sbr.rel (0) target = $region37
    $region36: #{generator_forward.1} parent=1 // pred_region
      %82 = dma.done [#allocation3], 32
    $region37: #{generator_forward.1} parent=1 // pred_fallthru
      _
    // Predicated region
    $region38: #{generator_forward.1} parent=1 // pred_check
      _
    $region39: #{generator_forward.1} parent=1 // pred_check_branch
      %84 = sbr.rel (0) target = $region41
    $region40: #{generator_forward.1} parent=1 // pred_region
      %85 = dma.done [#allocation5], 512
    $region41: #{generator_forward.1} parent=1 // pred_fallthru
      _
    // Predicated region
    $region42: #{generator_forward.1} parent=1 // pred_check
      _
    $region43: #{generator_forward.1} parent=1 // pred_check_branch
      %87 = sbr.rel (0) target = $region45
    $region44: #{generator_forward.1} parent=1 // pred_region
      %88 = dma.done [#allocation5], 4096
    $region45: #{generator_forward.1} parent=1 // pred_fallthru
      _
    // Predicated region
    $region46: #{generator_forward.1} parent=1 // pred_check
      _
    $region47: #{generator_forward.1} parent=1 // pred_check_branch
      %90 = sbr.rel (0) target = $region49
    $region48: #{generator_forward.1} parent=1 // pred_region
      %91 = dma.done [#allocation8], 4096
    $region49: #{generator_forward.1} parent=1 // pred_fallthru
      _
    // Predicated region
    $region50: #{generator_forward.1} parent=1 // pred_check
      _
    $region51: #{generator_forward.1} parent=1 // pred_check_branch
      %93 = sbr.rel (0) target = $region53
    $region52: #{generator_forward.1} parent=1 // pred_region
      %94 = dma.done [#allocation8], 2048
    $region53: #{generator_forward.1} parent=1 // pred_fallthru
      _
    %v96 = vld [vmem:[#allocation2] sm:$0x3]
    %v97 = vmul.f32 %v96, %v96
    %vm98 = vcmask 254976
    %v99 = vsel %vm98, %v97, 0.0
    %100 = vadd.xlane.f32.xlu0 %v99
    %v101 = vpop.xlane.xlu0 %100
    %v102 = vrcp.pop 32.0
    %v103 = vmul.f32 %v101, %v102
    %v104 = vadd.f32 %v103, 1e-08
    %v105 = vrsqrt.pop %v104
    %v106 = vmul.f32 %v96, %v105
    %v107 = vpack.c.bf16 %v106, %v106
    %v108 = vld [vmem:[#allocation4] sm:$0xff]
    %v109 = vld [vmem:[#allocation4 + $0x8] sm:$0xff]
    %v110 = vld [vmem:[#allocation4 + $0x10] sm:$0xff]
    %v111 = vld [vmem:[#allocation4 + $0x18] sm:$0xff]
    %v112 = vld [vmem:[%s2] sm:$0x3]
    %v114 = vlaneseq
    %v115 = vshrl.u32 %v114, 7
    %v116 = vsub.s32 0, %v115
    %v117 = vrot.slane %v112, %v116
    %v118 = vlaneseq
    %v119 = vshrl.u32 %v118, 7
    %v120 = vsub.s32 1, %v119
    %v121 = vrot.slane %v112, %v120
    %v128 = vunpack.c.l.b16 %v108
    %v129 = vunpack.c.h.b16 %v108
    %v130 = vunpack.c.l.b16 %v109
    %v131 = vunpack.c.h.b16 %v109
    %v132 = vunpack.c.l.b16 %v110
    %v133 = vunpack.c.h.b16 %v110
    %v134 = vunpack.c.l.b16 %v111
    %v135 = vunpack.c.h.b16 %v111
    %v136 = vpack.c.b16 %v130, %v128
    %v137 = vpack.c.b16 %v131, %v129
    %v138 = vpack.c.b16 %v134, %v132
    %v139 = vpack.c.b16 %v135, %v133
    %vm144 = vcmask 261120
    %v146 = vsel %vm144, %v107, 0
    %148 = vmatprep.subr.bf16.mxu0 0
    %149 = vmatpush1.bf16.msra.mxu0 0
    %150 = vmatprep.subr.bf16.mxu0 0
    %151 = vmatpush1.bf16.msra.mxu0 0
    %152 = vmatprep.subr.bf16.mxu0 0
    %153 = vmatpush1.bf16.msra.mxu0 0
    %154 = vmatprep.subr.bf16.mxu0 0
    %155 = vmatpush1.bf16.msra.mxu0 0
    %156 = vmatprep.subr.bf16.mxu0 0
    %157 = vmatpush1.bf16.msra.mxu0 0
    %158 = vmatprep.subr.bf16.mxu0 0
    %159 = vmatpush1.bf16.msra.mxu0 0
    %160 = vmatprep.subr.bf16.mxu0 %v139
    %161 = vmatpush1.bf16.msra.mxu0 %v138
    %162 = vmatprep.subr.bf16.mxu0 %v137
    %163 = vmatpush1.bf16.msra.mxu0 %v136
    %164 = vmatprep.subr.bf16.mxu0 0
    %165 = vmatpush2.bf16.msra.mxu0 0
    %166 = vmatprep.subr.bf16.mxu0 0
    %167 = vmatpush2.bf16.msra.mxu0 0
    %168 = vmatprep.subr.bf16.mxu0 0
    %169 = vmatpush2.bf16.msra.mxu0 0
    %170 = vmatprep.subr.bf16.mxu0 0
    %171 = vmatpush2.bf16.msra.mxu0 0
    %172 = vmatprep.subr.bf16.mxu0 0
    %173 = vmatpush2.bf16.msra.mxu0 0
    %174 = vmatprep.subr.bf16.mxu0 0
    %175 = vmatpush2.bf16.msra.mxu0 0
    %176 = vmatprep.subr.bf16.mxu0 0
    %177 = vmatpush2.bf16.msra.mxu0 0
    %178 = vmatprep.subr.bf16.mxu0 0
    %179 = vmatpush2.bf16.msra.mxu0 0
    %180 = vmatprep.mubr.bf16.mxu0 0
    %181 = vmatmul.mubr.bf16.gmra.mxu0 %v146
    %v182 = vpop.f32.mrf.mxu0
    %v183 = vadd.f32 %v117, %v182
    %v184 = vpop.f32.mrf.mxu0
    %v185 = vadd.f32 %v121, %v184
    %v186 = vpop.f32.mrf.mxu0
    %v187 = vpop.f32.mrf.mxu0
    %188 = vdwg.mxu0
    %v189 = vmul.f32 %v183, 0.2
    %v190 = vmul.f32 %v185, 0.2
    %v191 = vmax.f32 %v183, %v189
    %v192 = vmax.f32 %v185, %v190
    %v193 = vmul.f32 %v191, %v191
    %v194 = vmul.f32 %v192, %v192
    %v195 = vpack.c.bf16 %v193, %v193
    %v196 = vpack.c.bf16 %v194, %v194
    %v197 = vld [vmem:[#allocation6] sm:$0xff]
    %v198 = vld [vmem:[#allocation6 + $0x8] sm:$0xff]
    %v199 = vld [vmem:[#allocation6 + $0x10] sm:$0xff]
    %v200 = vld [vmem:[#allocation6 + $0x18] sm:$0xff]
    %v201 = vld [vmem:[#allocation6 + $0x20] sm:$0xff]
    %v202 = vld [vmem:[#allocation6 + $0x28] sm:$0xff]
    %v203 = vld [vmem:[#allocation6 + $0x30] sm:$0xff]
    %v204 = vld [vmem:[#allocation6 + $0x38] sm:$0xff]
    %v205 = vld [vmem:[#allocation6 + $0x40] sm:$0xff]
    %v206 = vld [vmem:[#allocation6 + $0x48] sm:$0xff]
    %v207 = vld [vmem:[#allocation6 + $0x50] sm:$0xff]
    %v208 = vld [vmem:[#allocation6 + $0x58] sm:$0xff]
    %v209 = vld [vmem:[#allocation6 + $0x60] sm:$0xff]
    %v210 = vld [vmem:[#allocation6 + $0x68] sm:$0xff]
    %v211 = vld [vmem:[#allocation6 + $0x70] sm:$0xff]
    %v212 = vld [vmem:[#allocation6 + $0x78] sm:$0xff]
    %v213 = vld [vmem:[#allocation6 + $0x80] sm:$0xff]
    %v214 = vld [vmem:[#allocation6 + $0x88] sm:$0xff]
    %v215 = vld [vmem:[#allocation6 + $0x90] sm:$0xff]
    %v216 = vld [vmem:[#allocation6 + $0x98] sm:$0xff]
    %v217 = vld [vmem:[#allocation6 + $0xa0] sm:$0xff]
    %v218 = vld [vmem:[#allocation6 + $0xa8] sm:$0xff]
    %v219 = vld [vmem:[#allocation6 + $0xb0] sm:$0xff]
    %v220 = vld [vmem:[#allocation6 + $0xb8] sm:$0xff]
    %v221 = vld [vmem:[#allocation6 + $0xc0] sm:$0xff]
    %v222 = vld [vmem:[#allocation6 + $0xc8] sm:$0xff]
    %v223 = vld [vmem:[#allocation6 + $0xd0] sm:$0xff]
    %v224 = vld [vmem:[#allocation6 + $0xd8] sm:$0xff]
    %v225 = vld [vmem:[#allocation6 + $0xe0] sm:$0xff]
    %v226 = vld [vmem:[#allocation6 + $0xe8] sm:$0xff]
    %v227 = vld [vmem:[#allocation6 + $0xf0] sm:$0xff]
    %v228 = vld [vmem:[#allocation6 + $0xf8] sm:$0xff]
    %v261 = vunpack.c.l.b16 %v197
    %v262 = vunpack.c.h.b16 %v197
    %v263 = vunpack.c.l.b16 %v198
    %v264 = vunpack.c.h.b16 %v198
    %v265 = vunpack.c.l.b16 %v199
    %v266 = vunpack.c.h.b16 %v199
    %v267 = vunpack.c.l.b16 %v200
    %v268 = vunpack.c.h.b16 %v200
    %v269 = vunpack.c.l.b16 %v201
    %v270 = vunpack.c.h.b16 %v201
    %v271 = vunpack.c.l.b16 %v202
    %v272 = vunpack.c.h.b16 %v202
    %v273 = vunpack.c.l.b16 %v203
    %v274 = vunpack.c.h.b16 %v203
    %v275 = vunpack.c.l.b16 %v204
    %v276 = vunpack.c.h.b16 %v204
    %v277 = vunpack.c.l.b16 %v205
    %v278 = vunpack.c.h.b16 %v205
    %v279 = vunpack.c.l.b16 %v206
    %v280 = vunpack.c.h.b16 %v206
    %v281 = vunpack.c.l.b16 %v207
    %v282 = vunpack.c.h.b16 %v207
    %v283 = vunpack.c.l.b16 %v208
    %v284 = vunpack.c.h.b16 %v208
    %v285 = vunpack.c.l.b16 %v209
    %v286 = vunpack.c.h.b16 %v209
    %v287 = vunpack.c.l.b16 %v210
    %v288 = vunpack.c.h.b16 %v210
    %v289 = vunpack.c.l.b16 %v211
    %v290 = vunpack.c.h.b16 %v211
    %v291 = vunpack.c.l.b16 %v212
    %v292 = vunpack.c.h.b16 %v212
    %v293 = vunpack.c.l.b16 %v213
    %v294 = vunpack.c.h.b16 %v213
    %v295 = vunpack.c.l.b16 %v214
    %v296 = vunpack.c.h.b16 %v214
    %v297 = vunpack.c.l.b16 %v215
    %v298 = vunpack.c.h.b16 %v215
    %v299 = vunpack.c.l.b16 %v216
    %v300 = vunpack.c.h.b16 %v216
    %v301 = vunpack.c.l.b16 %v217
    %v302 = vunpack.c.h.b16 %v217
    %v303 = vunpack.c.l.b16 %v218
    %v304 = vunpack.c.h.b16 %v218
    %v305 = vunpack.c.l.b16 %v219
    %v306 = vunpack.c.h.b16 %v219
    %v307 = vunpack.c.l.b16 %v220
    %v308 = vunpack.c.h.b16 %v220
    %v309 = vunpack.c.l.b16 %v221
    %v310 = vunpack.c.h.b16 %v221
    %v311 = vunpack.c.l.b16 %v222
    %v312 = vunpack.c.h.b16 %v222
    %v313 = vunpack.c.l.b16 %v223
    %v314 = vunpack.c.h.b16 %v223
    %v315 = vunpack.c.l.b16 %v224
    %v316 = vunpack.c.h.b16 %v224
    %v317 = vunpack.c.l.b16 %v225
    %v318 = vunpack.c.h.b16 %v225
    %v319 = vunpack.c.l.b16 %v226
    %v320 = vunpack.c.h.b16 %v226
    %v321 = vunpack.c.l.b16 %v227
    %v322 = vunpack.c.h.b16 %v227
    %v323 = vunpack.c.l.b16 %v228
    %v324 = vunpack.c.h.b16 %v228
    %v325 = vpack.c.b16 %v263, %v261
    %v326 = vpack.c.b16 %v264, %v262
    %v327 = vpack.c.b16 %v267, %v265
    %v328 = vpack.c.b16 %v268, %v266
    %v329 = vpack.c.b16 %v271, %v269
    %v330 = vpack.c.b16 %v272, %v270
    %v331 = vpack.c.b16 %v275, %v273
    %v332 = vpack.c.b16 %v276, %v274
    %v333 = vpack.c.b16 %v279, %v277
    %v334 = vpack.c.b16 %v280, %v278
    %v335 = vpack.c.b16 %v283, %v281
    %v336 = vpack.c.b16 %v284, %v282
    %v337 = vpack.c.b16 %v287, %v285
    %v338 = vpack.c.b16 %v288, %v286
    %v339 = vpack.c.b16 %v291, %v289
    %v340 = vpack.c.b16 %v292, %v290
    %v341 = vpack.c.b16 %v295, %v293
    %v342 = vpack.c.b16 %v296, %v294
    %v343 = vpack.c.b16 %v299, %v297
    %v344 = vpack.c.b16 %v300, %v298
    %v345 = vpack.c.b16 %v303, %v301
    %v346 = vpack.c.b16 %v304, %v302
    %v347 = vpack.c.b16 %v307, %v305
    %v348 = vpack.c.b16 %v308, %v306
    %v349 = vpack.c.b16 %v311, %v309
    %v350 = vpack.c.b16 %v312, %v310
    %v351 = vpack.c.b16 %v315, %v313
    %v352 = vpack.c.b16 %v316, %v314
    %v353 = vpack.c.b16 %v319, %v317
    %v354 = vpack.c.b16 %v320, %v318
    %v355 = vpack.c.b16 %v323, %v321
    %v356 = vpack.c.b16 %v324, %v322
    %389 = vmatprep.subr.bf16.mxu0 %v340
    %390 = vmatpush1.bf16.msra.mxu0 %v339
    %391 = vmatprep.subr.bf16.mxu0 %v338
    %392 = vmatpush1.bf16.msra.mxu0 %v337
    %393 = vmatprep.subr.bf16.mxu0 %v336
    %394 = vmatpush1.bf16.msra.mxu0 %v335
    %395 = vmatprep.subr.bf16.mxu0 %v334
    %396 = vmatpush1.bf16.msra.mxu0 %v333
    %397 = vmatprep.subr.bf16.mxu0 %v332
    %398 = vmatpush1.bf16.msra.mxu0 %v331
    %399 = vmatprep.subr.bf16.mxu0 %v330
    %400 = vmatpush1.bf16.msra.mxu0 %v329
    %401 = vmatprep.subr.bf16.mxu0 %v328
    %402 = vmatpush1.bf16.msra.mxu0 %v327
    %403 = vmatprep.subr.bf16.mxu0 %v326
    %404 = vmatpush1.bf16.msra.mxu0 %v325
    %405 = vmatprep.subr.bf16.mxu0 %v356
    %406 = vmatpush2.bf16.msra.mxu0 %v355
    %407 = vmatprep.subr.bf16.mxu0 %v354
    %408 = vmatpush2.bf16.msra.mxu0 %v353
    %409 = vmatprep.subr.bf16.mxu0 %v352
    %410 = vmatpush2.bf16.msra.mxu0 %v351
    %411 = vmatprep.subr.bf16.mxu0 %v350
    %412 = vmatpush2.bf16.msra.mxu0 %v349
    %413 = vmatprep.subr.bf16.mxu0 %v348
    %414 = vmatpush2.bf16.msra.mxu0 %v347
    %415 = vmatprep.subr.bf16.mxu0 %v346
    %416 = vmatpush2.bf16.msra.mxu0 %v345
    %417 = vmatprep.subr.bf16.mxu0 %v344
    %418 = vmatpush2.bf16.msra.mxu0 %v343
    %419 = vmatprep.subr.bf16.mxu0 %v342
    %420 = vmatpush2.bf16.msra.mxu0 %v341
    %421 = vmatprep.mubr.bf16.mxu0 %v196
    %422 = vmatmul.mubr.bf16.gmra.mxu0 %v195
    %v423 = vpop.f32.mrf.mxu0
    %v424 = vadd.f32 1e-08, %v423
    %v425 = vpop.f32.mrf.mxu0
    %v426 = vadd.f32 1e-08, %v425
    %v427 = vpop.f32.mrf.mxu0
    %v428 = vpop.f32.mrf.mxu0
    %429 = vdwg.mxu0
    %v430 = vrsqrt.pop %v424
    %v431 = vrsqrt.pop %v426
    %v432 = vmul.f32 %v191, %v430
    %v433 = vmul.f32 %v192, %v431
    %v434 = vpack.c.bf16 %v432, %v432
    %v435 = vpack.c.bf16 %v433, %v433
    %v436 = vld [vmem:[#allocation7] sm:$0xff]
    %v437 = vld [vmem:[#allocation7 + $0x8] sm:$0xff]
    %v438 = vld [vmem:[#allocation7 + $0x10] sm:$0xff]
    %v439 = vld [vmem:[#allocation7 + $0x18] sm:$0xff]
    %v440 = vld [vmem:[#allocation7 + $0x20] sm:$0xff]
    %v441 = vld [vmem:[#allocation7 + $0x28] sm:$0xff]
    %v442 = vld [vmem:[#allocation7 + $0x30] sm:$0xff]
    %v443 = vld [vmem:[#allocation7 + $0x38] sm:$0xff]
    %v444 = vld [vmem:[#allocation7 + $0x40] sm:$0xff]
    %v445 = vld [vmem:[#allocation7 + $0x48] sm:$0xff]
    %v446 = vld [vmem:[#allocation7 + $0x50] sm:$0xff]
    %v447 = vld [vmem:[#allocation7 + $0x58] sm:$0xff]
    %v448 = vld [vmem:[#allocation7 + $0x60] sm:$0xff]
    %v449 = vld [vmem:[#allocation7 + $0x68] sm:$0xff]
    %v450 = vld [vmem:[#allocation7 + $0x70] sm:$0xff]
    %v451 = vld [vmem:[#allocation7 + $0x78] sm:$0xff]
    %v452 = vld [vmem:[#allocation7 + $0x80] sm:$0xff]
    %v453 = vld [vmem:[#allocation7 + $0x88] sm:$0xff]
    %v454 = vld [vmem:[#allocation7 + $0x90] sm:$0xff]
    %v455 = vld [vmem:[#allocation7 + $0x98] sm:$0xff]
    %v456 = vld [vmem:[#allocation7 + $0xa0] sm:$0xff]
    %v457 = vld [vmem:[#allocation7 + $0xa8] sm:$0xff]
    %v458 = vld [vmem:[#allocation7 + $0xb0] sm:$0xff]
    %v459 = vld [vmem:[#allocation7 + $0xb8] sm:$0xff]
    %v460 = vld [vmem:[#allocation7 + $0xc0] sm:$0xff]
    %v461 = vld [vmem:[#allocation7 + $0xc8] sm:$0xff]
    %v462 = vld [vmem:[#allocation7 + $0xd0] sm:$0xff]
    %v463 = vld [vmem:[#allocation7 + $0xd8] sm:$0xff]
    %v464 = vld [vmem:[#allocation7 + $0xe0] sm:$0xff]
    %v465 = vld [vmem:[#allocation7 + $0xe8] sm:$0xff]
    %v466 = vld [vmem:[#allocation7 + $0xf0] sm:$0xff]
    %v467 = vld [vmem:[#allocation7 + $0xf8] sm:$0xff]
    %v468 = vld [vmem:[%s5] sm:$0x3]
    %v470 = vlaneseq
    %v471 = vshrl.u32 %v470, 7
    %v472 = vsub.s32 0, %v471
    %v473 = vrot.slane %v468, %v472
    %v474 = vlaneseq
    %v475 = vshrl.u32 %v474, 7
    %v476 = vsub.s32 1, %v475
    %v477 = vrot.slane %v468, %v476
    %v512 = vunpack.c.l.b16 %v436
    %v513 = vunpack.c.h.b16 %v436
    %v514 = vunpack.c.l.b16 %v437
    %v515 = vunpack.c.h.b16 %v437
    %v516 = vunpack.c.l.b16 %v438
    %v517 = vunpack.c.h.b16 %v438
    %v518 = vunpack.c.l.b16 %v439
    %v519 = vunpack.c.h.b16 %v439
    %v520 = vunpack.c.l.b16 %v440
    %v521 = vunpack.c.h.b16 %v440
    %v522 = vunpack.c.l.b16 %v441
    %v523 = vunpack.c.h.b16 %v441
    %v524 = vunpack.c.l.b16 %v442
    %v525 = vunpack.c.h.b16 %v442
    %v526 = vunpack.c.l.b16 %v443
    %v527 = vunpack.c.h.b16 %v443
    %v528 = vunpack.c.l.b16 %v444
    %v529 = vunpack.c.h.b16 %v444
    %v530 = vunpack.c.l.b16 %v445
    %v531 = vunpack.c.h.b16 %v445
    %v532 = vunpack.c.l.b16 %v446
    %v533 = vunpack.c.h.b16 %v446
    %v534 = vunpack.c.l.b16 %v447
    %v535 = vunpack.c.h.b16 %v447
    %v536 = vunpack.c.l.b16 %v448
    %v537 = vunpack.c.h.b16 %v448
    %v538 = vunpack.c.l.b16 %v449
    %v539 = vunpack.c.h.b16 %v449
    %v540 = vunpack.c.l.b16 %v450
    %v541 = vunpack.c.h.b16 %v450
    %v542 = vunpack.c.l.b16 %v451
    %v543 = vunpack.c.h.b16 %v451
    %v544 = vunpack.c.l.b16 %v452
    %v545 = vunpack.c.h.b16 %v452
    %v546 = vunpack.c.l.b16 %v453
    %v547 = vunpack.c.h.b16 %v453
    %v548 = vunpack.c.l.b16 %v454
    %v549 = vunpack.c.h.b16 %v454
    %v550 = vunpack.c.l.b16 %v455
    %v551 = vunpack.c.h.b16 %v455
    %v552 = vunpack.c.l.b16 %v456
    %v553 = vunpack.c.h.b16 %v456
    %v554 = vunpack.c.l.b16 %v457
    %v555 = vunpack.c.h.b16 %v457
    %v556 = vunpack.c.l.b16 %v458
    %v557 = vunpack.c.h.b16 %v458
    %v558 = vunpack.c.l.b16 %v459
    %v559 = vunpack.c.h.b16 %v459
    %v560 = vunpack.c.l.b16 %v460
    %v561 = vunpack.c.h.b16 %v460
    %v562 = vunpack.c.l.b16 %v461
    %v563 = vunpack.c.h.b16 %v461
    %v564 = vunpack.c.l.b16 %v462
    %v565 = vunpack.c.h.b16 %v462
    %v566 = vunpack.c.l.b16 %v463
    %v567 = vunpack.c.h.b16 %v463
    %v568 = vunpack.c.l.b16 %v464
    %v569 = vunpack.c.h.b16 %v464
    %v570 = vunpack.c.l.b16 %v465
    %v571 = vunpack.c.h.b16 %v465
    %v572 = vunpack.c.l.b16 %v466
    %v573 = vunpack.c.h.b16 %v466
    %v574 = vunpack.c.l.b16 %v467
    %v575 = vunpack.c.h.b16 %v467
    %v576 = vpack.c.b16 %v514, %v512
    %v577 = vpack.c.b16 %v515, %v513
    %v578 = vpack.c.b16 %v518, %v516
    %v579 = vpack.c.b16 %v519, %v517
    %v580 = vpack.c.b16 %v522, %v520
    %v581 = vpack.c.b16 %v523, %v521
    %v582 = vpack.c.b16 %v526, %v524
    %v583 = vpack.c.b16 %v527, %v525
    %v584 = vpack.c.b16 %v530, %v528
    %v585 = vpack.c.b16 %v531, %v529
    %v586 = vpack.c.b16 %v534, %v532
    %v587 = vpack.c.b16 %v535, %v533
    %v588 = vpack.c.b16 %v538, %v536
    %v589 = vpack.c.b16 %v539, %v537
    %v590 = vpack.c.b16 %v542, %v540
    %v591 = vpack.c.b16 %v543, %v541
    %v592 = vpack.c.b16 %v546, %v544
    %v593 = vpack.c.b16 %v547, %v545
    %v594 = vpack.c.b16 %v550, %v548
    %v595 = vpack.c.b16 %v551, %v549
    %v596 = vpack.c.b16 %v554, %v552
    %v597 = vpack.c.b16 %v555, %v553
    %v598 = vpack.c.b16 %v558, %v556
    %v599 = vpack.c.b16 %v559, %v557
    %v600 = vpack.c.b16 %v562, %v560
    %v601 = vpack.c.b16 %v563, %v561
    %v602 = vpack.c.b16 %v566, %v564
    %v603 = vpack.c.b16 %v567, %v565
    %v604 = vpack.c.b16 %v570, %v568
    %v605 = vpack.c.b16 %v571, %v569
    %v606 = vpack.c.b16 %v574, %v572
    %v607 = vpack.c.b16 %v575, %v573
    %640 = vmatprep.subr.bf16.mxu0 %v591
    %641 = vmatpush1.bf16.msra.mxu0 %v590
    %642 = vmatprep.subr.bf16.mxu0 %v589
    %643 = vmatpush1.bf16.msra.mxu0 %v588
    %644 = vmatprep.subr.bf16.mxu0 %v587
    %645 = vmatpush1.bf16.msra.mxu0 %v586
    %646 = vmatprep.subr.bf16.mxu0 %v585
    %647 = vmatpush1.bf16.msra.mxu0 %v584
    %648 = vmatprep.subr.bf16.mxu0 %v583
    %649 = vmatpush1.bf16.msra.mxu0 %v582
    %650 = vmatprep.subr.bf16.mxu0 %v581
    %651 = vmatpush1.bf16.msra.mxu0 %v580
    %652 = vmatprep.subr.bf16.mxu0 %v579
    %653 = vmatpush1.bf16.msra.mxu0 %v578
    %654 = vmatprep.subr.bf16.mxu0 %v577
    %655 = vmatpush1.bf16.msra.mxu0 %v576
    %656 = vmatprep.subr.bf16.mxu0 %v607
    %657 = vmatpush2.bf16.msra.mxu0 %v606
    %658 = vmatprep.subr.bf16.mxu0 %v605
    %659 = vmatpush2.bf16.msra.mxu0 %v604
    %660 = vmatprep.subr.bf16.mxu0 %v603
    %661 = vmatpush2.bf16.msra.mxu0 %v602
    %662 = vmatprep.subr.bf16.mxu0 %v601
    %663 = vmatpush2.bf16.msra.mxu0 %v600
    %664 = vmatprep.subr.bf16.mxu0 %v599
    %665 = vmatpush2.bf16.msra.mxu0 %v598
    %666 = vmatprep.subr.bf16.mxu0 %v597
    %667 = vmatpush2.bf16.msra.mxu0 %v596
    %668 = vmatprep.subr.bf16.mxu0 %v595
    %669 = vmatpush2.bf16.msra.mxu0 %v594
    %670 = vmatprep.subr.bf16.mxu0 %v593
    %671 = vmatpush2.bf16.msra.mxu0 %v592
    %672 = vmatprep.mubr.bf16.mxu0 %v435
    %673 = vmatmul.mubr.bf16.gmra.mxu0 %v434
    %v674 = vpop.f32.mrf.mxu0
    %v675 = vadd.f32 %v473, %v674
    %v676 = vpop.f32.mrf.mxu0
    %v677 = vadd.f32 %v477, %v676
    %v678 = vpop.f32.mrf.mxu0
    %v679 = vpop.f32.mrf.mxu0
    %680 = vdwg.mxu0
    %v681 = vmul.f32 %v675, 0.2
    %v682 = vmul.f32 %v677, 0.2
    %v683 = vmax.f32 %v675, %v681
    %v684 = vmax.f32 %v677, %v682
    %v685 = vmul.f32 %v683, %v683
    %v686 = vmul.f32 %v684, %v684
    %v687 = vpack.c.bf16 %v685, %v685
    %v688 = vpack.c.bf16 %v686, %v686
    %689 = vmatprep.subr.bf16.mxu0 %v340
    %690 = vmatpush1.bf16.msra.mxu0 %v339
    %691 = vmatprep.subr.bf16.mxu0 %v338
    %692 = vmatpush1.bf16.msra.mxu0 %v337
    %693 = vmatprep.subr.bf16.mxu0 %v336
    %694 = vmatpush1.bf16.msra.mxu0 %v335
    %695 = vmatprep.subr.bf16.mxu0 %v334
    %696 = vmatpush1.bf16.msra.mxu0 %v333
    %697 = vmatprep.subr.bf16.mxu0 %v332
    %698 = vmatpush1.bf16.msra.mxu0 %v331
    %699 = vmatprep.subr.bf16.mxu0 %v330
    %700 = vmatpush1.bf16.msra.mxu0 %v329
    %701 = vmatprep.subr.bf16.mxu0 %v328
    %702 = vmatpush1.bf16.msra.mxu0 %v327
    %703 = vmatprep.subr.bf16.mxu0 %v326
    %704 = vmatpush1.bf16.msra.mxu0 %v325
    %705 = vmatprep.subr.bf16.mxu0 %v356
    %706 = vmatpush2.bf16.msra.mxu0 %v355
    %707 = vmatprep.subr.bf16.mxu0 %v354
    %708 = vmatpush2.bf16.msra.mxu0 %v353
    %709 = vmatprep.subr.bf16.mxu0 %v352
    %710 = vmatpush2.bf16.msra.mxu0 %v351
    %711 = vmatprep.subr.bf16.mxu0 %v350
    %712 = vmatpush2.bf16.msra.mxu0 %v349
    %713 = vmatprep.subr.bf16.mxu0 %v348
    %714 = vmatpush2.bf16.msra.mxu0 %v347
    %715 = vmatprep.subr.bf16.mxu0 %v346
    %716 = vmatpush2.bf16.msra.mxu0 %v345
    %717 = vmatprep.subr.bf16.mxu0 %v344
    %718 = vmatpush2.bf16.msra.mxu0 %v343
    %719 = vmatprep.subr.bf16.mxu0 %v342
    %720 = vmatpush2.bf16.msra.mxu0 %v341
    %721 = vmatprep.mubr.bf16.mxu0 %v688
    %722 = vmatmul.mubr.bf16.gmra.mxu0 %v687
    %v723 = vpop.f32.mrf.mxu0
    %v724 = vadd.f32 1e-08, %v723
    %v725 = vpop.f32.mrf.mxu0
    %v726 = vadd.f32 1e-08, %v725
    %v727 = vpop.f32.mrf.mxu0
    %v728 = vpop.f32.mrf.mxu0
    %729 = vdwg.mxu0
    %v730 = vrsqrt.pop %v724
    %v731 = vrsqrt.pop %v726
    %v732 = vmul.f32 %v683, %v730
    %v733 = vmul.f32 %v684, %v731
    %v734 = vpack.c.bf16 %v732, %v732
    %v735 = vpack.c.bf16 %v733, %v733
    %v736 = vld [vmem:[#allocation9] sm:$0xf]
    %v737 = vld [vmem:[#allocation9 + $0x4] sm:$0xf]
    %v738 = vld [vmem:[#allocation9 + $0x8] sm:$0xf]
    %v739 = vld [vmem:[#allocation9 + $0xc] sm:$0xf]
    %v740 = vld [vmem:[#allocation9 + $0x10] sm:$0xf]
    %v741 = vld [vmem:[#allocation9 + $0x14] sm:$0xf]
    %v742 = vld [vmem:[#allocation9 + $0x18] sm:$0xf]
    %v743 = vld [vmem:[#allocation9 + $0x1c] sm:$0xf]
    %v744 = vld [vmem:[#allocation9 + $0x20] sm:$0xf]
    %v745 = vld [vmem:[#allocation9 + $0x24] sm:$0xf]
    %v746 = vld [vmem:[#allocation9 + $0x28] sm:$0xf]
    %v747 = vld [vmem:[#allocation9 + $0x2c] sm:$0xf]
    %v748 = vld [vmem:[#allocation9 + $0x30] sm:$0xf]
    %v749 = vld [vmem:[#allocation9 + $0x34] sm:$0xf]
    %v750 = vld [vmem:[#allocation9 + $0x38] sm:$0xf]
    %v751 = vld [vmem:[#allocation9 + $0x3c] sm:$0xf]
    %v752 = vld [vmem:[#allocation9 + $0x40] sm:$0xf]
    %v753 = vld [vmem:[#allocation9 + $0x44] sm:$0xf]
    %v754 = vld [vmem:[#allocation9 + $0x48] sm:$0xf]
    %v755 = vld [vmem:[#allocation9 + $0x4c] sm:$0xf]
    %v756 = vld [vmem:[#allocation9 + $0x50] sm:$0xf]
    %v757 = vld [vmem:[#allocation9 + $0x54] sm:$0xf]
    %v758 = vld [vmem:[#allocation9 + $0x58] sm:$0xf]
    %v759 = vld [vmem:[#allocation9 + $0x5c] sm:$0xf]
    %v760 = vld [vmem:[#allocation9 + $0x60] sm:$0xf]
    %v761 = vld [vmem:[#allocation9 + $0x64] sm:$0xf]
    %v762 = vld [vmem:[#allocation9 + $0x68] sm:$0xf]
    %v763 = vld [vmem:[#allocation9 + $0x6c] sm:$0xf]
    %v764 = vld [vmem:[#allocation9 + $0x70] sm:$0xf]
    %v765 = vld [vmem:[#allocation9 + $0x74] sm:$0xf]
    %v766 = vld [vmem:[#allocation9 + $0x78] sm:$0xf]
    %v767 = vld [vmem:[#allocation9 + $0x7c] sm:$0xf]
    %v768 = vld [vmem:[%s7] sm:$0x1]
    %v770 = vlaneseq
    %v771 = vshrl.u32 %v770, 7
    %v772 = vsub.s32 0, %v771
    %v773 = vrot.slane %v768, %v772
    %v807 = vunpack.c.l.b16 %v736
    %v808 = vunpack.c.l.b16 %v737
    %v809 = vunpack.c.l.b16 %v738
    %v810 = vunpack.c.l.b16 %v739
    %v811 = vunpack.c.l.b16 %v740
    %v812 = vunpack.c.l.b16 %v741
    %v813 = vunpack.c.l.b16 %v742
    %v814 = vunpack.c.l.b16 %v743
    %v815 = vunpack.c.l.b16 %v744
    %v816 = vunpack.c.l.b16 %v745
    %v817 = vunpack.c.l.b16 %v746
    %v818 = vunpack.c.l.b16 %v747
    %v819 = vunpack.c.l.b16 %v748
    %v820 = vunpack.c.l.b16 %v749
    %v821 = vunpack.c.l.b16 %v750
    %v822 = vunpack.c.l.b16 %v751
    %v823 = vunpack.c.l.b16 %v752
    %v824 = vunpack.c.l.b16 %v753
    %v825 = vunpack.c.l.b16 %v754
    %v826 = vunpack.c.l.b16 %v755
    %v827 = vunpack.c.l.b16 %v756
    %v828 = vunpack.c.l.b16 %v757
    %v829 = vunpack.c.l.b16 %v758
    %v830 = vunpack.c.l.b16 %v759
    %v831 = vunpack.c.l.b16 %v760
    %v832 = vunpack.c.l.b16 %v761
    %v833 = vunpack.c.l.b16 %v762
    %v834 = vunpack.c.l.b16 %v763
    %v835 = vunpack.c.l.b16 %v764
    %v836 = vunpack.c.l.b16 %v765
    %v837 = vunpack.c.l.b16 %v766
    %v838 = vunpack.c.l.b16 %v767
    %v839 = vpack.c.b16 %v808, %v807
    %v840 = vpack.c.b16 %v810, %v809
    %v841 = vpack.c.b16 %v812, %v811
    %v842 = vpack.c.b16 %v814, %v813
    %v843 = vpack.c.b16 %v816, %v815
    %v844 = vpack.c.b16 %v818, %v817
    %v845 = vpack.c.b16 %v820, %v819
    %v846 = vpack.c.b16 %v822, %v821
    %v847 = vpack.c.b16 %v824, %v823
    %v848 = vpack.c.b16 %v826, %v825
    %v849 = vpack.c.b16 %v828, %v827
    %v850 = vpack.c.b16 %v830, %v829
    %v851 = vpack.c.b16 %v832, %v831
    %v852 = vpack.c.b16 %v834, %v833
    %v853 = vpack.c.b16 %v836, %v835
    %v854 = vpack.c.b16 %v838, %v837
    %871 = vmatprep.subr.bf16.mxu0 0
    %872 = vmatpush1.bf16.msra.mxu0 %v846
    %873 = vmatprep.subr.bf16.mxu0 0
    %874 = vmatpush1.bf16.msra.mxu0 %v845
    %875 = vmatprep.subr.bf16.mxu0 0
    %876 = vmatpush1.bf16.msra.mxu0 %v844
    %877 = vmatprep.subr.bf16.mxu0 0
    %878 = vmatpush1.bf16.msra.mxu0 %v843
    %879 = vmatprep.subr.bf16.mxu0 0
    %880 = vmatpush1.bf16.msra.mxu0 %v842
    %881 = vmatprep.subr.bf16.mxu0 0
    %882 = vmatpush1.bf16.msra.mxu0 %v841
    %883 = vmatprep.subr.bf16.mxu0 0
    %884 = vmatpush1.bf16.msra.mxu0 %v840
    %885 = vmatprep.subr.bf16.mxu0 0
    %886 = vmatpush1.bf16.msra.mxu0 %v839
    %887 = vmatprep.subr.bf16.mxu0 0
    %888 = vmatpush2.bf16.msra.mxu0 %v854
    %889 = vmatprep.subr.bf16.mxu0 0
    %890 = vmatpush2.bf16.msra.mxu0 %v853
    %891 = vmatprep.subr.bf16.mxu0 0
    %892 = vmatpush2.bf16.msra.mxu0 %v852
    %893 = vmatprep.subr.bf16.mxu0 0
    %894 = vmatpush2.bf16.msra.mxu0 %v851
    %895 = vmatprep.subr.bf16.mxu0 0
    %896 = vmatpush2.bf16.msra.mxu0 %v850
    %897 = vmatprep.subr.bf16.mxu0 0
    %898 = vmatpush2.bf16.msra.mxu0 %v849
    %899 = vmatprep.subr.bf16.mxu0 0
    %900 = vmatpush2.bf16.msra.mxu0 %v848
    %901 = vmatprep.subr.bf16.mxu0 0
    %902 = vmatpush2.bf16.msra.mxu0 %v847
    %903 = vmatprep.mubr.bf16.mxu0 %v735
    %904 = vmatmul.mubr.bf16.gmra.mxu0 %v734
    %v905 = vpop.f32.mrf.mxu0
    %v906 = vadd.f32 %v773, %v905
    %v907 = vpop.f32.mrf.mxu0
    %v908 = vpop.f32.mrf.mxu0
    %v909 = vpop.f32.mrf.mxu0
    %910 = vdwg.mxu0
    %911 = vst [vmem:[%s8] sm:$0x3] %v906
    // Predicated region
    $region54: #{generator_forward.1} parent=1 // pred_check
      _
    $region55: #{generator_forward.1} parent=1 // pred_check_branch
      %913 = sbr.rel (0) target = $region57
    $region56: #{generator_forward.1} parent=1 // pred_region
      _
    $region57: #{generator_forward.1} parent=1 // pred_fallthru
      _
    // Predicated region
    $region58: #{generator_forward.1} parent=1 // pred_check
      _
    $region59: #{generator_forward.1} parent=1 // pred_check_branch
      %915 = sbr.rel (0) target = $region61
    $region60: #{generator_forward.1} parent=1 // pred_region
      _
    $region61: #{generator_forward.1} parent=1 // pred_fallthru
      _
    %916 = vsyncpa [#allocation3], 1
    %917 = vsyncpa [#allocation5], 1
    %918 = vsyncpa [#allocation8], 1

</llo_original>
